<compile_context>
chip_gen: v6e
topology: v6e:2x2x1
jax: 0.10.0
libtpu: 0.0.40
codegen_flags: <defaults>
</compile_context>

<pallas_src>
import functools

import jax
import jax.numpy as jnp
from jax.experimental import pallas as pl
from jax.experimental.pallas import tpu as pltpu

LANE = 128
SUBLANE = 8


# ----------------------------------------------------------------------------
# Kernels
# ----------------------------------------------------------------------------
def _bn_fused_kernel(x_ref, gamma_ref, beta_ref, out_ref, mean_ref, var_ref, *, eps):
    """Single pass: the full batch for one feature tile is resident in VMEM."""
    x = x_ref[...].astype(jnp.float32)                       # (N, TILE_F)
    mean = jnp.mean(x, axis=0, keepdims=True)                # (1, TILE_F)
    centered = x - mean
    var = jnp.mean(centered * centered, axis=0, keepdims=True)

    # Fold gamma into the inverse std (row op) before the NxTILE broadcast.
    scale = gamma_ref[...].astype(jnp.float32) * jax.lax.rsqrt(var + eps)
    out_ref[...] = (centered * scale
                    + beta_ref[...].astype(jnp.float32)).astype(out_ref.dtype)

    mean_ref[...] = mean.astype(mean_ref.dtype)
    var_ref[...] = var.astype(var_ref.dtype)


def _bn_stats_kernel(x_ref, mean_ref, var_ref, sum_sc, sq_sc, *, n_total, tile_n):
    """Pass 1 of the large-N path: per-lane sum / sum-of-squares accumulation."""
    bi = pl.program_id(1)                                    # batch chunk (last axis)

    @pl.when(bi == 0)
    def _():
        sum_sc[...] = jnp.zeros_like(sum_sc)
        sq_sc[...] = jnp.zeros_like(sq_sc)

    x = x_ref[...].astype(jnp.float32)                       # (TILE_N, TILE_F)
    # Mask batch-edge garbage rows (partial last chunk) so they don't pollute
    # the per-lane sums.  Lane-edge garbage stays per-lane and is dropped later.
    row = jax.lax.broadcasted_iota(jnp.int32, x.shape, 0) + bi * tile_n
    x = jnp.where(row < n_total, x, 0.0)

    sum_sc[...] += jnp.sum(x, axis=0, keepdims=True)
    sq_sc[...] += jnp.sum(x * x, axis=0, keepdims=True)

    @pl.when(bi == pl.num_programs(1) - 1)
    def _():
        inv_n = 1.0 / float(n_total)
        mean = sum_sc[...] * inv_n
        var = jnp.maximum(sq_sc[...] * inv_n - mean * mean, 0.0)
        mean_ref[...] = mean.astype(mean_ref.dtype)
        var_ref[...] = var.astype(var_ref.dtype)


def _bn_apply_kernel(x_ref, gamma_ref, beta_ref, mean_ref, var_ref, out_ref, *, eps):
    """Pass 2 of the large-N path: normalize with precomputed mean/var."""
    x = x_ref[...].astype(jnp.float32)
    mean = mean_ref[...].astype(jnp.float32)
    scale = (gamma_ref[...].astype(jnp.float32)
             * jax.lax.rsqrt(var_ref[...].astype(jnp.float32) + eps))
    shift = beta_ref[...].astype(jnp.float32) - mean * scale
    out_ref[...] = (x * scale + shift).astype(out_ref.dtype)


# ----------------------------------------------------------------------------
# Wrapper helpers
# ----------------------------------------------------------------------------
def _vmem_limit_bytes():
    try:
        info = pltpu.get_tpu_info()
        phys = int(getattr(info, "vmem_capacity_bytes", 64 << 20))
    except Exception:  # interpret mode / CPU tracing fallback
        phys = 64 << 20                                      # conservative (v7x per-TC)
    return min(phys * 3 // 4, 96 << 20)


def _choose_tile_f_fused(rows, n_lane_blocks, itemsize, vmem_limit,
                         target_bytes=2 << 20):
    """Pick tile_f (in lanes*128) for the single-pass path; report if it fits."""
    # Keep >= 2 feature tiles when possible so v7x's two TCs both get work.
    max_lanes = n_lane_blocks if n_lane_blocks < 2 else pl.cdiv(n_lane_blocks, 2)

    lanes = 1
    while lanes < max_lanes and rows * lanes * LANE * itemsize < target_bytes:
        lanes += 1

    def footprint(l):
        # 2x double-buffered (x + out) blocks in the native dtype plus ~4 live
        # f32 temporaries of the same block footprint.
        return rows * l * LANE * (4 * itemsize + 4 * 4)

    while lanes > 1 and footprint(lanes) > vmem_limit:
        lanes = max(1, lanes // 2)

    return lanes * LANE, footprint(lanes) <= vmem_limit


def _choose_two_pass_tiles(n_rows, n_lane_blocks, itemsize, target_bytes=2 << 20):
    max_lanes = n_lane_blocks if n_lane_blocks < 2 else pl.cdiv(n_lane_blocks, 2)
    lanes = min(max_lanes, 4)                                # <= 512 lanes / tile
    tile_f = lanes * LANE
    tile_n = max(SUBLANE,
                 (target_bytes // (tile_f * itemsize)) // SUBLANE * SUBLANE)
    tile_n = min(tile_n, pl.cdiv(n_rows, SUBLANE) * SUBLANE)
    return tile_f, int(tile_n)


# ----------------------------------------------------------------------------
# Public entry point
# ----------------------------------------------------------------------------
def batch_norm1d_train(x, gamma, beta, moving_mean, moving_var,
                       eps=1e-5, momentum=0.9,
                       force_two_pass=False, tile_n=None, tile_f=None):
    """Training-mode BatchNorm1d forward.

    Returns (out, new_moving_mean, new_moving_var), mirroring the PyTorch
    module's output plus its in-place running-stat update
    (m = momentum*m + (1-momentum)*batch_stat, biased variance).
    """
    N, F = x.shape
    eps = float(eps)
    momentum = float(momentum)
    itemsize = jnp.dtype(x.dtype).itemsize
    n_lane_blocks = pl.cdiv(F, LANE)
    vmem_limit = int(_vmem_limit_bytes())

    if tile_f is not None:
        tf_fused, fits = int(tile_f), True
    else:
        tf_fused, fits = _choose_tile_f_fused(N, n_lane_blocks, itemsize, vmem_limit)
    use_fused = fits and not force_two_pass

    if use_fused:
        tf = tf_fused
        grid = (pl.cdiv(F, tf),)
        out, bmean, bvar = pl.pallas_call(
            functools.partial(_bn_fused_kernel, eps=eps),
            grid=grid,
            in_specs=[pl.BlockSpec((N, tf), lambda j: (0, j)),
                      pl.BlockSpec((1, tf), lambda j: (0, j)),
                      pl.BlockSpec((1, tf), lambda j: (0, j))],
            out_specs=(pl.BlockSpec((N, tf), lambda j: (0, j)),
                       pl.BlockSpec((1, tf), lambda j: (0, j)),
                       pl.BlockSpec((1, tf), lambda j: (0, j))),
            out_shape=(jax.ShapeDtypeStruct((N, F), x.dtype),
                       jax.ShapeDtypeStruct((1, F), jnp.float32),
                       jax.ShapeDtypeStruct((1, F), jnp.float32)),
            compiler_params=pltpu.CompilerParams(
                dimension_semantics=("parallel",),
                vmem_limit_bytes=vmem_limit),
        )(x, gamma, beta)
    else:
        # Large-N fallback: two passes (stats accumulation, then normalize).
        tf_auto, tn_auto = _choose_two_pass_tiles(N, n_lane_blocks, itemsize)
        tf = int(tile_f) if tile_f is not None else tf_auto
        tn = int(tile_n) if tile_n is not None else tn_auto
        nfg = pl.cdiv(F, tf)
        nbg = pl.cdiv(N, tn)

        bmean, bvar = pl.pallas_call(
            functools.partial(_bn_stats_kernel, n_total=N, tile_n=tn),
            grid=(nfg, nbg),
            in_specs=[pl.BlockSpec((tn, tf), lambda j, i: (i, j))],
            out_specs=(pl.BlockSpec((1, tf), lambda j, i: (0, j)),
                       pl.BlockSpec((1, tf), lambda j, i: (0, j))),
            out_shape=(jax.ShapeDtypeStruct((1, F), jnp.float32),
                       jax.ShapeDtypeStruct((1, F), jnp.float32)),
            scratch_shapes=[pltpu.VMEM((1, tf), jnp.float32),
                            pltpu.VMEM((1, tf), jnp.float32)],
            compiler_params=pltpu.CompilerParams(
                dimension_semantics=("parallel", "arbitrary"),
                vmem_limit_bytes=vmem_limit),
        )(x)

        out = pl.pallas_call(
            functools.partial(_bn_apply_kernel, eps=eps),
            grid=(nfg, nbg),
            in_specs=[pl.BlockSpec((tn, tf), lambda j, i: (i, j)),
                      pl.BlockSpec((1, tf), lambda j, i: (0, j)),
                      pl.BlockSpec((1, tf), lambda j, i: (0, j)),
                      pl.BlockSpec((1, tf), lambda j, i: (0, j)),
                      pl.BlockSpec((1, tf), lambda j, i: (0, j))],
            out_specs=pl.BlockSpec((tn, tf), lambda j, i: (i, j)),
            out_shape=jax.ShapeDtypeStruct((N, F), x.dtype),
            compiler_params=pltpu.CompilerParams(
                dimension_semantics=("parallel", "parallel"),
                vmem_limit_bytes=vmem_limit),
        )(x, gamma, beta, bmean, bvar)

    # Tiny (1, F) EMA update in plain JAX (module semantics: biased variance,
    # m = momentum*m + (1-momentum)*batch_stat).
    new_mm = (momentum * moving_mean.astype(jnp.float32)
              + (1.0 - momentum) * bmean).astype(moving_mean.dtype)
    new_mv = (momentum * moving_var.astype(jnp.float32)
              + (1.0 - momentum) * bvar).astype(moving_var.dtype)
    return out, new_mm, new_mv


# TODO(synk): eval-mode branch (normalize by moving stats) not wired up; the
# module defaults to training mode, which is what is implemented here.


if __name__ == "__main__":
    key = jax.random.PRNGKey(0)
    eps, momentum = 1e-5, 0.9

    # ---- primary shapes (match the module's natural small config) ----------
    batch, feature_num = 8, 32
    x = jax.random.normal(key, (batch, feature_num), dtype=jnp.float32)
    gamma = jnp.ones((1, feature_num), dtype=jnp.float32)
    beta = jnp.ones((1, feature_num), dtype=jnp.float32)
    moving_mean = jnp.zeros((1, feature_num), dtype=jnp.float32)
    moving_var = jnp.zeros((1, feature_num), dtype=jnp.float32)

    out, new_mm, new_mv = batch_norm1d_train(
        x, gamma, beta, moving_mean, moving_var, eps=eps, momentum=momentum)
    jax.block_until_ready((out, new_mm, new_mv))

    mean_ref = jnp.mean(x, axis=0, keepdims=True)
    var_ref = jnp.mean((x - mean_ref) ** 2, axis=0, keepdims=True)
    out_ref = gamma * ((x - mean_ref) / jnp.sqrt(var_ref + eps)) + beta
    mm_ref = momentum * moving_mean + (1.0 - momentum) * mean_ref
    mv_ref = momentum * moving_var + (1.0 - momentum) * var_ref
    assert jnp.allclose(out, out_ref, atol=1e-5, rtol=1e-5)
    assert jnp.allclose(new_mm, mm_ref, atol=1e-6, rtol=1e-6)
    assert jnp.allclose(new_mv, mv_ref, atol=1e-6, rtol=1e-6)

    # ---- also exercise the large-N two-pass fallback and the non-128-multiple
    # feature edge at a small, fast shape (forced path, partial blocks on both
    # axes) ------------------------------------------------------------------
    b2, f2 = 70, 200
    x2 = jax.random.normal(jax.random.PRNGKey(1), (b2, f2), dtype=jnp.float32)
    g2 = jnp.ones((1, f2), dtype=jnp.float32)
    bt2 = jnp.full((1, f2), 0.5, dtype=jnp.float32)
    mm2 = jnp.zeros((1, f2), dtype=jnp.float32)
    mv2 = jnp.zeros((1, f2), dtype=jnp.float32)

    out2, nm2, nv2 = batch_norm1d_train(
        x2, g2, bt2, mm2, mv2, eps=eps, momentum=momentum,
        force_two_pass=True, tile_n=16, tile_f=128)
    jax.block_until_ready((out2, nm2, nv2))

    m2 = jnp.mean(x2, axis=0, keepdims=True)
    v2 = jnp.mean((x2 - m2) ** 2, axis=0, keepdims=True)
    o2 = g2 * ((x2 - m2) / jnp.sqrt(v2 + eps)) + bt2
    assert jnp.allclose(out2, o2, atol=1e-4, rtol=1e-4)
    assert jnp.allclose(nm2, momentum * mm2 + (1.0 - momentum) * m2,
                        atol=1e-5, rtol=1e-5)
    assert jnp.allclose(nv2, momentum * mv2 + (1.0 - momentum) * v2,
                        atol=1e-5, rtol=1e-5)

    print("KERNEL_OK")
</pallas_src>

<mosaic_0001>
module attributes {stable_mosaic.version = 11 : i64} {
  func.func @_bn_fused_kernel(%arg0: i32, %arg1: memref<8x128xf32, #tpu.memory_space<vmem>>, %arg2: memref<1x128xf32, #tpu.memory_space<vmem>>, %arg3: memref<1x128xf32, #tpu.memory_space<vmem>>, %arg4: memref<8x128xf32, #tpu.memory_space<vmem>>, %arg5: memref<1x128xf32, #tpu.memory_space<vmem>>, %arg6: memref<1x128xf32, #tpu.memory_space<vmem>>) attributes {dimension_semantics = [#tpu.dimension_semantics<parallel>], iteration_bounds = array<i64: 1>, scalar_prefetch = 0 : i64, scratch_operands = 0 : i64, tpu.core_type = #tpu.core_type<tc>, window_params = [{transform_indices = @transform_0, window_bounds = array<i64: 8, 128>}, {transform_indices = @transform_1, window_bounds = array<i64: 1, 128>}, {transform_indices = @transform_2, window_bounds = array<i64: 1, 128>}, {transform_indices = @transform_3, window_bounds = array<i64: 8, 128>}, {transform_indices = @transform_4, window_bounds = array<i64: 1, 128>}, {transform_indices = @transform_5, window_bounds = array<i64: 1, 128>}]} {
    %c0 = arith.constant 0 : index
    %c0_0 = arith.constant 0 : index
    %0 = vector.load %arg1[%c0, %c0_0] : memref<8x128xf32, #tpu.memory_space<vmem>>, vector<8x128xf32>
    %cst = arith.constant dense<0.000000e+00> : vector<128xf32>
    %1 = vector.multi_reduction <add>, %0, %cst [0] : vector<8x128xf32> to vector<128xf32>
    %2 = vector.shape_cast %1 : vector<128xf32> to vector<1x128xf32>
    %cst_1 = arith.constant 8.000000e+00 : f32
    %3 = vector.broadcast %cst_1 : f32 to vector<1x128xf32>
    %4 = arith.divf %2, %3 : vector<1x128xf32>
    %5 = vector.broadcast %4 : vector<1x128xf32> to vector<8x128xf32>
    %6 = arith.subf %0, %5 : vector<8x128xf32>
    %7 = arith.mulf %6, %6 : vector<8x128xf32>
    %cst_2 = arith.constant dense<0.000000e+00> : vector<128xf32>
    %8 = vector.multi_reduction <add>, %7, %cst_2 [0] : vector<8x128xf32> to vector<128xf32>
    %9 = vector.shape_cast %8 : vector<128xf32> to vector<1x128xf32>
    %cst_3 = arith.constant 8.000000e+00 : f32
    %10 = vector.broadcast %cst_3 : f32 to vector<1x128xf32>
    %11 = arith.divf %9, %10 : vector<1x128xf32>
    %c0_4 = arith.constant 0 : index
    %c0_5 = arith.constant 0 : index
    %12 = vector.load %arg2[%c0_4, %c0_5] : memref<1x128xf32, #tpu.memory_space<vmem>>, vector<1x128xf32>
    %cst_6 = arith.constant 9.99999974E-6 : f32
    %13 = vector.broadcast %cst_6 : f32 to vector<1x128xf32>
    %14 = arith.addf %11, %13 : vector<1x128xf32>
    %15 = math.rsqrt %14 : vector<1x128xf32>
    %16 = arith.mulf %12, %15 : vector<1x128xf32>
    %17 = vector.broadcast %16 : vector<1x128xf32> to vector<8x128xf32>
    %18 = arith.mulf %6, %17 : vector<8x128xf32>
    %c0_7 = arith.constant 0 : index
    %c0_8 = arith.constant 0 : index
    %19 = vector.load %arg3[%c0_7, %c0_8] : memref<1x128xf32, #tpu.memory_space<vmem>>, vector<1x128xf32>
    %20 = vector.broadcast %19 : vector<1x128xf32> to vector<8x128xf32>
    %21 = arith.addf %18, %20 : vector<8x128xf32>
    %c0_9 = arith.constant 0 : index
    %c0_10 = arith.constant 0 : index
    %22 = vector.load %arg4[%c0_9, %c0_10] : memref<8x128xf32, #tpu.memory_space<vmem>>, vector<8x128xf32>
    tpu.vector_store %arg4[%c0_9, %c0_10], %21 {strides = array<i32>} : memref<8x128xf32, #tpu.memory_space<vmem>>, vector<8x128xf32>,
    %c0_11 = arith.constant 0 : index
    %c0_12 = arith.constant 0 : index
    %23 = vector.load %arg5[%c0_11, %c0_12] : memref<1x128xf32, #tpu.memory_space<vmem>>, vector<1x128xf32>
    tpu.vector_store %arg5[%c0_11, %c0_12], %4 {strides = array<i32>} : memref<1x128xf32, #tpu.memory_space<vmem>>, vector<1x128xf32>,
    %c0_13 = arith.constant 0 : index
    %c0_14 = arith.constant 0 : index
    %24 = vector.load %arg6[%c0_13, %c0_14] : memref<1x128xf32, #tpu.memory_space<vmem>>, vector<1x128xf32>
    tpu.vector_store %arg6[%c0_13, %c0_14], %11 {strides = array<i32>} : memref<1x128xf32, #tpu.memory_space<vmem>>, vector<1x128xf32>,
    return
  }
  func.func @transform_0(%arg0: i32) -> (i32, i32) {
    %c0_i32 = arith.constant 0 : i32
    %c0_i32_0 = arith.constant 0 : i32
    return %c0_i32, %arg0 : i32, i32
  }
  func.func @transform_1(%arg0: i32) -> (i32, i32) {
    %c0_i32 = arith.constant 0 : i32
    %c0_i32_0 = arith.constant 0 : i32
    return %c0_i32, %arg0 : i32, i32
  }
  func.func @transform_2(%arg0: i32) -> (i32, i32) {
    %c0_i32 = arith.constant 0 : i32
    %c0_i32_0 = arith.constant 0 : i32
    return %c0_i32, %arg0 : i32, i32
  }
  func.func @transform_3(%arg0: i32) -> (i32, i32) {
    %c0_i32 = arith.constant 0 : i32
    %c0_i32_0 = arith.constant 0 : i32
    return %c0_i32, %arg0 : i32, i32
  }
  func.func @transform_4(%arg0: i32) -> (i32, i32) {
    %c0_i32 = arith.constant 0 : i32
    %c0_i32_0 = arith.constant 0 : i32
    return %c0_i32, %arg0 : i32, i32
  }
  func.func @transform_5(%arg0: i32) -> (i32, i32) {
    %c0_i32 = arith.constant 0 : i32
    %c0_i32_0 = arith.constant 0 : i32
    return %c0_i32, %arg0 : i32, i32
  }
}

</mosaic_0001>

<llo_original>
// kernel: tpu_custom_call.1
$region0: #{tpu_custom_call.1}
  #allocation0 [shape = 'u32[]', space=smem, size = 0x4, offset = 0x4, fixed_abs, tag = 'smem constant byte address 0x4 - core index']
  #allocation1 [shape = 'u32[144,128]{1,0:T(1,128)}', space=vmem, size = 0x12000, scoped, tag = 'internal scratch']
  %s0 = inlined_call_operand.hbm [shape: f32[8,32], index: 0, kind: input, shape index: {}]
  %s1 = inlined_call_operand.vmem [shape: f32[1,32], index: 1, kind: input, shape index: {}]
  %s2 = inlined_call_operand.vmem [shape: f32[1,32], index: 2, kind: input, shape index: {}]
  %s3 = inlined_call_operand.hbm [shape: f32[8,32], index: 3, kind: output, shape index: {0}]
  %s4 = inlined_call_operand.hbm [shape: f32[1,32], index: 4, kind: output, shape index: {1}]
  %s5 = inlined_call_operand.hbm [shape: f32[1,32], index: 5, kind: output, shape index: {2}]
  %6 = xla_tuple %s3, %s4, %s5
  %s7 = sld [smem:[#allocation0]]
  $region42: #{tpu_custom_call.1} parent=0
    _
  %s9 = ssub.s32 1, %s7
  %s10 = scalar_select 0, %s9, %s7
  $region1: #{tpu_custom_call.1} parent=0
    #allocation2 [shape = 'u8[4096]{0}', space=vmem, size = 0x1000, scoped, tag = 'input window, operand 0, single buffered']
    #allocation3 [shape = 's32[1]{0}', space=sflag, size = 0x4, scoped, tag = 'scoped memory for tpu_custom_call.1']
    #allocation4 [shape = 's32[1]{0}', space=sflag, size = 0x4, scoped, tag = 'scoped memory for tpu_custom_call.1']
    #allocation5 [shape = 'u8[4096]{0}', space=vmem, size = 0x1000, scoped, tag = 'output window, operand 0, single buffered']
    #allocation6 [shape = 'u8[512]{0}', space=vmem, size = 0x400, scoped, tag = 'output window, operand 1, single buffered']
    #allocation7 [shape = 's32[1]{0}', space=sflag, size = 0x4, scoped, tag = 'scoped memory for tpu_custom_call.1']
    #allocation8 [shape = 'u8[512]{0}', space=vmem, size = 0x400, scoped, tag = 'output window, operand 2, single buffered']
    %11 = vsyncpa [#allocation3], 0
    %12 = vsyncpa [#allocation4], 0
    %13 = vsyncpa [#allocation7], 0
    // Predicated region
    $region2: #{tpu_custom_call.1} parent=1 // pred_check
      _
    $region3: #{tpu_custom_call.1} parent=1 // pred_check_branch
      %15 = sbr.rel (0) target = $region5
    $region4: #{tpu_custom_call.1} parent=1 // pred_region
      %s17 = ssub.s32 128, 128
      %18 = vsyncadd [#allocation3], %s17
      %s20 = sshll.u32 [#allocation2], 4
      %s21 = int_to_ptr.vmem [resolvable:$true] %s20
      %23 = dma.hbm_to_vmem [thread:$0]  %s0, 128, %s21, [#allocation3]
    $region5: #{tpu_custom_call.1} parent=1 // pred_fallthru
      _
    // Predicated region
    $region6: #{tpu_custom_call.1} parent=1 // pred_check
      _
    $region7: #{tpu_custom_call.1} parent=1 // pred_check_branch
      %25 = sbr.rel (0) target = $region9
    $region8: #{tpu_custom_call.1} parent=1 // pred_region
      _
    $region9: #{tpu_custom_call.1} parent=1 // pred_fallthru
      _
    // Predicated region
    $region10: #{tpu_custom_call.1} parent=1 // pred_check
      _
    $region11: #{tpu_custom_call.1} parent=1 // pred_check_branch
      %27 = sbr.rel (0) target = $region13
    $region12: #{tpu_custom_call.1} parent=1 // pred_region
      _
    $region13: #{tpu_custom_call.1} parent=1 // pred_fallthru
      _
    // Predicated region
    $region14: #{tpu_custom_call.1} parent=1 // pred_check
      _
    $region15: #{tpu_custom_call.1} parent=1 // pred_check_branch
      %29 = sbr.rel (0) target = $region17
    $region16: #{tpu_custom_call.1} parent=1 // pred_region
      %30 = dma.done [#allocation3], 128
    $region17: #{tpu_custom_call.1} parent=1 // pred_fallthru
      _
    %v31 = vld [vmem:[#allocation2] sm:$0xff]
    %v32 = vrot.slane %v31, 4
    %v33 = vadd.f32 %v31, %v32
    %v34 = vrot.slane %v33, 2
    %v35 = vadd.f32 %v33, %v34
    %v36 = vrot.slane %v35, 1
    %v37 = vadd.f32 %v35, %v36
    %v38 = vrcp.pop 8.0
    %v39 = vmul.f32 %v37, %v38
    %v40 = vsub.f32 %v31, %v39
    %v41 = vmul.f32 %v40, %v40
    %v42 = vrot.slane %v41, 4
    %v43 = vadd.f32 %v41, %v42
    %v44 = vrot.slane %v43, 2
    %v45 = vadd.f32 %v43, %v44
    %v46 = vrot.slane %v45, 1
    %v47 = vadd.f32 %v45, %v46
    %v48 = vmul.f32 %v47, %v38
    %v49 = vld [vmem:[%s1] sm:$0x1]
    %v50 = vadd.f32 %v48, 1e-05
    %v51 = vrsqrt.pop %v50
    %v52 = vmul.f32 %v49, %v51
    %v54 = vlaneseq
    %v55 = vshrl.u32 %v54, 7
    %v56 = vsub.s32 0, %v55
    %v57 = vrot.slane %v52, %v56
    %v59 = vmul.f32 %v40, %v57
    %v60 = vld [vmem:[%s2] sm:$0x1]
    %v62 = vlaneseq
    %v63 = vshrl.u32 %v62, 7
    %v64 = vsub.s32 0, %v63
    %v65 = vrot.slane %v60, %v64
    %v67 = vadd.f32 %v59, %v65
    %68 = vst [vmem:[#allocation5] sm:$0xff] %v67
    %69 = vst [vmem:[#allocation6] sm:$0x1] %v39
    %70 = vst [vmem:[#allocation8] sm:$0x1] %v48
    // Predicated region
    $region18: #{tpu_custom_call.1} parent=1 // pred_check
      _
    $region19: #{tpu_custom_call.1} parent=1 // pred_check_branch
      %72 = sbr.rel (0) target = $region21
    $region20: #{tpu_custom_call.1} parent=1 // pred_region
      %s74 = ssub.s32 128, 128
      %75 = vsyncadd [#allocation4], %s74
      %s77 = sshll.u32 [#allocation5], 4
      %s78 = int_to_ptr.vmem [resolvable:$true] %s77
      %80 = dma.vmem_to_hbm [thread:$0]  %s78, 128, %s3, [#allocation4]
    $region21: #{tpu_custom_call.1} parent=1 // pred_fallthru
      _
    // Predicated region
    $region22: #{tpu_custom_call.1} parent=1 // pred_check
      _
    $region23: #{tpu_custom_call.1} parent=1 // pred_check_branch
      %82 = sbr.rel (0) target = $region25
    $region24: #{tpu_custom_call.1} parent=1 // pred_region
      %s84 = ssub.s32 16, 16
      %85 = vsyncadd [#allocation7], %s84
      %s87 = sshll.u32 [#allocation6], 4
      %s88 = int_to_ptr.vmem [resolvable:$true] %s87
      %90 = dma.vmem_to_hbm [thread:$0]  %s88, 16, %s4, [#allocation7]
    $region25: #{tpu_custom_call.1} parent=1 // pred_fallthru
      _
    // Predicated region
    $region26: #{tpu_custom_call.1} parent=1 // pred_check
      _
    $region27: #{tpu_custom_call.1} parent=1 // pred_check_branch
      %92 = sbr.rel (0) target = $region29
    $region28: #{tpu_custom_call.1} parent=1 // pred_region
      %s94 = ssub.s32 16, 16
      %95 = vsyncadd [#allocation7], %s94
      %s97 = sshll.u32 [#allocation8], 4
      %s98 = int_to_ptr.vmem [resolvable:$true] %s97
      %100 = dma.vmem_to_hbm [thread:$0]  %s98, 16, %s5, [#allocation7]
    $region29: #{tpu_custom_call.1} parent=1 // pred_fallthru
      _
    // Predicated region
    $region30: #{tpu_custom_call.1} parent=1 // pred_check
      _
    $region31: #{tpu_custom_call.1} parent=1 // pred_check_branch
      %102 = sbr.rel (0) target = $region33
    $region32: #{tpu_custom_call.1} parent=1 // pred_region
      %103 = dma.done [#allocation4], 128
    $region33: #{tpu_custom_call.1} parent=1 // pred_fallthru
      _
    // Predicated region
    $region34: #{tpu_custom_call.1} parent=1 // pred_check
      _
    $region35: #{tpu_custom_call.1} parent=1 // pred_check_branch
      %105 = sbr.rel (0) target = $region37
    $region36: #{tpu_custom_call.1} parent=1 // pred_region
      %106 = dma.done [#allocation7], 16
    $region37: #{tpu_custom_call.1} parent=1 // pred_fallthru
      _
    // Predicated region
    $region38: #{tpu_custom_call.1} parent=1 // pred_check
      _
    $region39: #{tpu_custom_call.1} parent=1 // pred_check_branch
      %108 = sbr.rel (0) target = $region41
    $region40: #{tpu_custom_call.1} parent=1 // pred_region
      %109 = dma.done [#allocation7], 16
    $region41: #{tpu_custom_call.1} parent=1 // pred_fallthru
      _
    %110 = vsyncpa [#allocation3], 1
    %111 = vsyncpa [#allocation4], 1
    %112 = vsyncpa [#allocation7], 1

</llo_original>
